<compile_context>
chip_gen: v5e
topology: v5e:2x2
jax: 0.10.0
libtpu: 0.0.40
codegen_flags: <defaults>
</compile_context>

<pallas_src>
import jax
import jax.numpy as jnp
from jax.experimental import pallas as pl
from jax.experimental.pallas import tpu as pltpu


def attn_kernel(enc_ref, qcb_ref, mask_ref, wk1_ref, wvt_ref, vrow_ref,
                ctx_ref, attn_ref):
    Bb, S = mask_ref.shape
    E = enc_ref.shape[1]

    enc2 = enc_ref[...]                                                     # [Bb*S, E]

    # Key path: single tall MXU matmul (Wk^T @ W1^T folded in the wrapper),
    # f32 accumulation.
    kw1 = jnp.dot(enc2, wk1_ref[...], preferred_element_type=jnp.float32)   # [Bb*S, E]

    # Fused per-batch additive term (query + coverage + bias), broadcast over S.
    # S is a multiple of 8 (wrapper-padded), so this reshape is a layout no-op.
    qcb = qcb_ref[...].astype(jnp.float32)                                  # [Bb, E]
    pre = jnp.tanh(kw1.reshape(Bb, S, E) + qcb[:, None, :])                 # [Bb, S, E]

    # Scoring: VPU multiply + lane reduction (never a degenerate [., E] @ [E, 1]
    # MXU matmul).
    v_vec = vrow_ref[...].astype(jnp.float32)                               # [1, E]
    energy = jnp.sum(pre * v_vec[None, :, :], axis=-1)                      # [Bb, S]

    # Encoder mask (and wrapper-side S padding): masked positions -> -inf.
    energy = jnp.where(mask_ref[...] > 0.5, energy, -jnp.inf)

    # Softmax over the sequence axis (lane axis of energy/attn).
    m = jnp.max(energy, axis=-1, keepdims=True)                             # [Bb, 1]
    e = jnp.exp(energy - m)                                                 # [Bb, S]
    denom = jnp.sum(e, axis=-1, keepdims=True)                              # [Bb, 1]
    attn = e * pl.reciprocal(denom, approx=True)                            # [Bb, S]

    # Value path reordered: softmax-weighted reduction over enc on the VPU first
    # (sum_s a_s * (x_s @ Wv^T) == (sum_s a_s * x_s) @ Wv^T), then one small
    # [Bb, E] @ [E, E] MXU matmul instead of the full [Bb*S, E] @ [E, E] one.
    enc3 = enc2.reshape(Bb, S, E).astype(jnp.float32)                       # layout no-op
    w_enc = jnp.sum(attn[:, :, None] * enc3, axis=1)                        # [Bb, E]
    ctx = jnp.dot(w_enc.astype(enc2.dtype), wvt_ref[...],
                  preferred_element_type=jnp.float32)                       # [Bb, E]

    ctx_ref[...] = ctx.astype(ctx_ref.dtype)
    attn_ref[...] = attn.astype(attn_ref.dtype)


def _round_up(x, m):
    return ((x + m - 1) // m) * m


def _auto_block_b(B, Sp, E, enc_itemsize, vmem_limit_bytes):
    # Tall MXU M and a reasonably sized enc tile (>= ~2 MiB) per grid step.
    target_rows = max(512, (2 * 1024 * 1024) // max(E * enc_itemsize, 1))
    bb = max(1, target_rows // max(Sp, 1))
    # Per-batch-row VMEM in flight: double-buffered enc tile + ~3 live f32
    # [Bb*S, E] intermediates (kw1 / pre / f32 enc view).
    per_row = Sp * E * (2 * enc_itemsize + 3 * 4)
    fixed = 2 * E * E * enc_itemsize + 4 * E
    budget = max(vmem_limit_bytes * 3 // 4 - fixed, per_row)
    bb = min(bb, max(1, budget // per_row))
    bb = min(bb, B)
    # Keep >= 2 grid steps so v7x's second TensorCore gets work (harmless on
    # single-TC v5e/v6e: one extra grid step).
    if B > 1:
        bb = min(bb, (B + 1) // 2)
    return int(bb)


def attention_forward(enc_output, state_h, coverage, params, *, mask=None,
                      block_b=None, stream_dtype=None, vmem_limit_bytes=None):
    """Pallas implementation of Attention.forward.

    Returns (context [B, E], attention_weights [B, S, 1])."""
    B, S, E = enc_output.shape
    f32 = jnp.float32
    hp = jax.lax.Precision.HIGHEST

    if stream_dtype is None:
        stream_dtype = enc_output.dtype
    stream_dtype = jnp.dtype(stream_dtype)

    # Fold the projection chains (exact up to f32 reassociation):
    #   enc @ Wk^T @ W1^T == enc @ (Wk^T @ W1^T)
    wk1 = jnp.dot(params["Wk"].T.astype(f32), params["W1"].T.astype(f32),
                  precision=hp)                                             # [E, E]
    wv_t = params["Wv"].T                                                   # [E, E]
    wq2 = jnp.dot(params["Wq"].T.astype(f32), params["W2"].T.astype(f32),
                  precision=hp)                                             # [D, E]

    # Hoist the M=1 per-batch projections out of the kernel and fuse into a single
    # additive term: qcb = h_last @ (Wq^T @ W2^T) + coverage @ W3^T + b      [B, E]
    q_last = state_h[-1].astype(f32)                                        # [B, D]
    qcb = (jnp.dot(q_last, wq2, precision=hp)
           + jnp.dot(coverage.astype(f32), params["W3"].T.astype(f32), precision=hp)
           + params["b"][None, :].astype(f32))

    v_row = params["V"].astype(f32).reshape(1, E)                           # [1, E]

    # Generation-aware VMEM limit: ~48 MiB on v7x (64 MiB physical),
    # ~96 MiB on v5e/v6e (128 MiB physical).
    if vmem_limit_bytes is None:
        try:
            cap = int(getattr(pltpu.get_tpu_info(), "vmem_capacity_bytes", 0)) \
                  or 64 * 1024 * 1024
        except Exception:
            cap = 64 * 1024 * 1024
        vmem_limit_bytes = max(32 * 1024 * 1024,
                               min(cap * 3 // 4, 96 * 1024 * 1024))

    # Pad S to a sublane multiple so flat<->3D views inside the kernel are layout
    # no-ops; padded positions are masked out (-inf -> attn 0).
    Sp = _round_up(S, 8)

    if block_b is None:
        block_b = _auto_block_b(B, Sp, E, stream_dtype.itemsize, vmem_limit_bytes)
    Bb = max(1, min(int(block_b), B))
    G = pl.cdiv(B, Bb)
    Bp = G * Bb

    # Explicit zero padding for B % Bb tails (instead of garbage edge reads).
    enc_p = enc_output
    if (Bp != B) or (Sp != S):
        enc_p = jnp.pad(enc_output, ((0, Bp - B), (0, Sp - S), (0, 0)))
    qcb_p = jnp.pad(qcb, ((0, Bp - B), (0, 0))) if Bp != B else qcb

    base_mask = jnp.ones((B, S), f32) if mask is None else mask.astype(f32)
    mask_full = jnp.zeros((Bp, Sp), f32).at[:B, :S].set(base_mask)
    if Bp != B:
        # Keep padded batch rows non-degenerate (their outputs are sliced away).
        mask_full = mask_full.at[B:, 0].set(1.0)

    # Wrapper-side flatten / pre-blocking (free layout plumbing):
    #   enc  -> [Bp*Sp, E]  (tall MXU M dimension, block second-minor = Bb*Sp % 8 == 0)
    #   qcb/mask/outs -> [G, Bb, ...]  (block trailing dims == full array dims)
    enc_flat = enc_p.reshape(Bp * Sp, E).astype(stream_dtype)
    qcb3 = qcb_p.reshape(G, Bb, E)
    mask3 = mask_full.reshape(G, Bb, Sp)
    wk1_s = wk1.astype(stream_dtype)
    wvt_s = wv_t.astype(stream_dtype)

    ctx3, attn3 = pl.pallas_call(
        attn_kernel,
        out_shape=(
            jax.ShapeDtypeStruct((G, Bb, E), f32),
            jax.ShapeDtypeStruct((G, Bb, Sp), f32),   # lane-dense attn (sequence last)
        ),
        grid_spec=pltpu.PrefetchScalarGridSpec(
            num_scalar_prefetch=0,
            grid=(G,),
            in_specs=[
                pl.BlockSpec((Bb * Sp, E), lambda i: (i, 0)),      # flat enc tile
                pl.BlockSpec((None, Bb, E), lambda i: (i, 0, 0)),  # fused q/cov/bias
                pl.BlockSpec((None, Bb, Sp), lambda i: (i, 0, 0)), # mask (+ padding)
                pl.BlockSpec((E, E), lambda i: (0, 0)),            # Wk^T @ W1^T
                pl.BlockSpec((E, E), lambda i: (0, 0)),            # Wv^T
                pl.BlockSpec((1, E), lambda i: (0, 0)),            # V scoring vector
            ],
            out_specs=[
                pl.BlockSpec((None, Bb, E), lambda i: (i, 0, 0)),
                pl.BlockSpec((None, Bb, Sp), lambda i: (i, 0, 0)),
            ],
        ),
        compiler_params=pltpu.CompilerParams(
            dimension_semantics=("parallel",),
            vmem_limit_bytes=int(vmem_limit_bytes),
        ),
    )(enc_flat, qcb3, mask3, wk1_s, wvt_s, v_row)

    # TODO(synk): for production shapes with S, E < 128, pad the output lane dims to
    # 128 for unmasked stores (secondary win; moot when S/E >= 128).

    # Module interface: context [B, E], attention_weights [B, S, 1].
    ctx = ctx3.reshape(Bp, E)[:B]
    attn = attn3.reshape(Bp, Sp)[:B, :S, None]
    return ctx, attn


def attention_reference(enc_output, state_h, coverage, params, mask=None):
    """Plain-JAX reference mirroring the PyTorch forward."""
    q = state_h[-1][:, None, :]                              # [B, 1, D]
    K = enc_output @ params["Wk"].T
    V = enc_output @ params["Wv"].T
    Q = q @ params["Wq"].T
    cW3 = coverage[:, None, :] @ params["W3"].T              # [B, 1, E]
    pre = jnp.tanh(K @ params["W1"].T + Q @ params["W2"].T + cW3 + params["b"])
    energy = pre @ params["V"].T                             # [B, S, 1]
    if mask is not None:
        energy = jnp.where(mask[:, :, None] == 0, -jnp.inf, energy)
    attn = jax.nn.softmax(energy, axis=1)
    context = jnp.sum(attn * V, axis=1)
    return context, attn


def make_params(key, E, D, Vc):
    ks = jax.random.split(key, 7)
    s = 0.1
    return {
        "Wk": s * jax.random.normal(ks[0], (E, E), jnp.float32),
        "Wv": s * jax.random.normal(ks[1], (E, E), jnp.float32),
        "Wq": s * jax.random.normal(ks[2], (E, D), jnp.float32),
        "V":  s * jax.random.normal(ks[3], (1, E), jnp.float32),
        "W1": s * jax.random.normal(ks[4], (E, E), jnp.float32),
        "W2": s * jax.random.normal(ks[5], (E, E), jnp.float32),
        "W3": s * jax.random.normal(ks[6], (E, Vc), jnp.float32),
        "b":  jnp.zeros((E,), jnp.float32),
    }


if __name__ == "__main__":
    B, S, E, D, Vc, L = 2, 8, 32, 32, 64, 2

    key = jax.random.PRNGKey(0)
    kp, k1, k2, k3, k4 = jax.random.split(key, 5)
    params = make_params(kp, E, D, Vc)

    enc_output = jax.random.normal(k1, (B, S, E), jnp.float32)
    state_h = jax.random.normal(k2, (L, B, D), jnp.float32)
    coverage = jax.random.normal(k3, (B, Vc), jnp.float32)

    # Tolerance absorbs the (exact-math-equivalent) weight-fold / value-path
    # reassociation plus the EUP approximate reciprocal in the softmax denominator.
    tol = dict(atol=5e-3, rtol=5e-3)

    # 1) mask=None, f32 streaming.
    context, attn = attention_forward(enc_output, state_h, coverage, params)
    jax.block_until_ready((context, attn))
    ref_ctx, ref_attn = attention_reference(enc_output, state_h, coverage, params)
    assert context.shape == (B, E)
    assert attn.shape == (B, S, 1)
    assert jnp.allclose(context, ref_ctx, **tol)
    assert jnp.allclose(attn, ref_attn, **tol)

    # 2) With an encoder mask (masked_fill(-inf) path).
    mask = (jax.random.uniform(k4, (B, S)) > 0.3).astype(jnp.float32)
    mask = mask.at[:, 0].set(1.0)   # keep every row non-degenerate
    ctx_m, attn_m = attention_forward(enc_output, state_h, coverage, params, mask=mask)
    jax.block_until_ready((ctx_m, attn_m))
    ref_ctx_m, ref_attn_m = attention_reference(enc_output, state_h, coverage, params,
                                                mask=mask)
    assert jnp.allclose(ctx_m, ref_ctx_m, **tol)
    assert jnp.allclose(attn_m, ref_attn_m, **tol)

    # 3) bf16 streaming of enc / weights (HBM-bound production path); f32 MXU accum.
    ctx_bf, attn_bf = attention_forward(enc_output, state_h, coverage, params,
                                        stream_dtype=jnp.bfloat16)
    jax.block_until_ready((ctx_bf, attn_bf))
    assert jnp.allclose(ctx_bf, ref_ctx, atol=5e-2, rtol=5e-2)
    assert jnp.allclose(attn_bf, ref_attn, atol=5e-2, rtol=5e-2)

    print("KERNEL_OK")
</pallas_src>

<mosaic_0001>
module attributes {stable_mosaic.version = 11 : i64} {
  func.func @attn_kernel(%arg0: i32, %arg1: memref<8x32xf32, #tpu.memory_space<vmem>>, %arg2: memref<1x1x32xf32, #tpu.memory_space<vmem>>, %arg3: memref<1x1x8xf32, #tpu.memory_space<vmem>>, %arg4: memref<32x32xf32, #tpu.memory_space<vmem>>, %arg5: memref<32x32xf32, #tpu.memory_space<vmem>>, %arg6: memref<1x32xf32, #tpu.memory_space<vmem>>, %arg7: memref<1x1x32xf32, #tpu.memory_space<vmem>>, %arg8: memref<1x1x8xf32, #tpu.memory_space<vmem>>) attributes {dimension_semantics = [#tpu.dimension_semantics<parallel>], iteration_bounds = array<i64: 2>, scalar_prefetch = 0 : i64, scratch_operands = 0 : i64, tpu.core_type = #tpu.core_type<tc>, window_params = [{transform_indices = @transform_0, window_bounds = array<i64: 8, 32>}, {transform_indices = @transform_1, window_bounds = array<i64: 1, 1, 32>}, {transform_indices = @transform_2, window_bounds = array<i64: 1, 1, 8>}, {pipeline_mode = #tpu.pipeline_mode<synchronous>, transform_indices = @transform_3, window_bounds = array<i64: 32, 32>}, {pipeline_mode = #tpu.pipeline_mode<synchronous>, transform_indices = @transform_4, window_bounds = array<i64: 32, 32>}, {pipeline_mode = #tpu.pipeline_mode<synchronous>, transform_indices = @transform_5, window_bounds = array<i64: 1, 32>}, {transform_indices = @transform_6, window_bounds = array<i64: 1, 1, 32>}, {transform_indices = @transform_7, window_bounds = array<i64: 1, 1, 8>}]} {
    %c0 = arith.constant 0 : index
    %c0_0 = arith.constant 0 : index
    %0 = vector.load %arg1[%c0, %c0_0] : memref<8x32xf32, #tpu.memory_space<vmem>>, vector<8x32xf32>
    %c0_1 = arith.constant 0 : index
    %c0_2 = arith.constant 0 : index
    %1 = vector.load %arg4[%c0_1, %c0_2] : memref<32x32xf32, #tpu.memory_space<vmem>>, vector<32x32xf32>
    %cst = arith.constant dense<0.000000e+00> : vector<8x32xf32>
    %2 = tpu.matmul %0, %1, %cst {dimension_numbers = #tpu.dot_dimension_numbers<[1], [0], [0], [1], [0, 0, 1, 1], [], []>} : vector<8x32xf32>, vector<32x32xf32>, vector<8x32xf32> -> vector<8x32xf32>
    %c0_3 = arith.constant 0 : index
    %c0_4 = arith.constant 0 : index
    %c0_5 = arith.constant 0 : index
    %3 = vector.load %arg2[%c0_3, %c0_4, %c0_5] : memref<1x1x32xf32, #tpu.memory_space<vmem>>, vector<1x1x32xf32>
    %4 = vector.shape_cast %3 : vector<1x1x32xf32> to vector<1x32xf32>
    %5 = vector.shape_cast %2 : vector<8x32xf32> to vector<1x8x32xf32>
    %6 = vector.shape_cast %4 : vector<1x32xf32> to vector<1x1x32xf32>
    %7 = vector.broadcast %6 : vector<1x1x32xf32> to vector<1x8x32xf32>
    %8 = arith.addf %5, %7 : vector<1x8x32xf32>
    %9 = math.tanh %8 : vector<1x8x32xf32>
    %c0_6 = arith.constant 0 : index
    %c0_7 = arith.constant 0 : index
    %10 = vector.load %arg6[%c0_6, %c0_7] : memref<1x32xf32, #tpu.memory_space<vmem>>, vector<1x32xf32>
    %11 = vector.shape_cast %10 : vector<1x32xf32> to vector<1x1x32xf32>
    %12 = vector.broadcast %11 : vector<1x1x32xf32> to vector<1x8x32xf32>
    %13 = arith.mulf %9, %12 : vector<1x8x32xf32>
    %cst_8 = arith.constant dense<0.000000e+00> : vector<1x8xf32>
    %14 = vector.multi_reduction <add>, %13, %cst_8 [2] : vector<1x8x32xf32> to vector<1x8xf32>
    %c0_9 = arith.constant 0 : index
    %c0_10 = arith.constant 0 : index
    %c0_11 = arith.constant 0 : index
    %15 = vector.load %arg3[%c0_9, %c0_10, %c0_11] : memref<1x1x8xf32, #tpu.memory_space<vmem>>, vector<1x1x8xf32>
    %16 = vector.shape_cast %15 : vector<1x1x8xf32> to vector<1x8xf32>
    %cst_12 = arith.constant 5.000000e-01 : f32
    %17 = vector.broadcast %cst_12 : f32 to vector<1x8xf32>
    %18 = arith.cmpf ogt, %16, %17 : vector<1x8xf32>
    %cst_13 = arith.constant 0xFF800000 : f32
    %19 = vector.broadcast %cst_13 : f32 to vector<1x8xf32>
    %20 = arith.select %18, %14, %19 : vector<1x8xi1>, vector<1x8xf32>
    %cst_14 = arith.constant dense<0xFF800000> : vector<1xf32>
    %21 = vector.multi_reduction <maximumf>, %20, %cst_14 [1] : vector<1x8xf32> to vector<1xf32>
    %22 = vector.shape_cast %21 : vector<1xf32> to vector<1x1xf32>
    %23 = vector.broadcast %22 : vector<1x1xf32> to vector<1x8xf32>
    %24 = arith.subf %20, %23 : vector<1x8xf32>
    %25 = math.exp %24 : vector<1x8xf32>
    %cst_15 = arith.constant dense<0.000000e+00> : vector<1xf32>
    %26 = vector.multi_reduction <add>, %25, %cst_15 [1] : vector<1x8xf32> to vector<1xf32>
    %27 = vector.shape_cast %26 : vector<1xf32> to vector<1x1xf32>
    %28 = tpu.reciprocal %27 {approx = true} : vector<1x1xf32> -> vector<1x1xf32>
    %29 = vector.broadcast %28 : vector<1x1xf32> to vector<1x8xf32>
    %30 = arith.mulf %25, %29 : vector<1x8xf32>
    %31 = vector.shape_cast %0 : vector<8x32xf32> to vector<1x8x32xf32>
    %32 = vector.shape_cast %30 : vector<1x8xf32> to vector<1x8x1xf32>
    %33 = vector.broadcast %32 : vector<1x8x1xf32> to vector<1x8x32xf32>
    %34 = arith.mulf %33, %31 : vector<1x8x32xf32>
    %cst_16 = arith.constant dense<0.000000e+00> : vector<1x32xf32>
    %35 = vector.multi_reduction <add>, %34, %cst_16 [1] : vector<1x8x32xf32> to vector<1x32xf32>
    %c0_17 = arith.constant 0 : index
    %c0_18 = arith.constant 0 : index
    %36 = vector.load %arg5[%c0_17, %c0_18] : memref<32x32xf32, #tpu.memory_space<vmem>>, vector<32x32xf32>
    %cst_19 = arith.constant dense<0.000000e+00> : vector<1x32xf32>
    %37 = tpu.matmul %35, %36, %cst_19 {dimension_numbers = #tpu.dot_dimension_numbers<[1], [0], [0], [1], [0, 0, 1, 1], [], []>} : vector<1x32xf32>, vector<32x32xf32>, vector<1x32xf32> -> vector<1x32xf32>
    %c0_20 = arith.constant 0 : index
    %c0_21 = arith.constant 0 : index
    %c0_22 = arith.constant 0 : index
    %38 = vector.load %arg7[%c0_20, %c0_21, %c0_22] : memref<1x1x32xf32, #tpu.memory_space<vmem>>, vector<1x1x32xf32>
    %39 = vector.shape_cast %38 : vector<1x1x32xf32> to vector<1x32xf32>
    %40 = vector.shape_cast %37 : vector<1x32xf32> to vector<1x1x32xf32>
    tpu.vector_store %arg7[%c0_20, %c0_21, %c0_22], %40 {strides = array<i32>} : memref<1x1x32xf32, #tpu.memory_space<vmem>>, vector<1x1x32xf32>,
    %c0_23 = arith.constant 0 : index
    %c0_24 = arith.constant 0 : index
    %c0_25 = arith.constant 0 : index
    %41 = vector.load %arg8[%c0_23, %c0_24, %c0_25] : memref<1x1x8xf32, #tpu.memory_space<vmem>>, vector<1x1x8xf32>
    %42 = vector.shape_cast %41 : vector<1x1x8xf32> to vector<1x8xf32>
    %43 = vector.shape_cast %30 : vector<1x8xf32> to vector<1x1x8xf32>
    tpu.vector_store %arg8[%c0_23, %c0_24, %c0_25], %43 {strides = array<i32>} : memref<1x1x8xf32, #tpu.memory_space<vmem>>, vector<1x1x8xf32>,
    return
  }
  func.func @transform_0(%arg0: i32) -> (i32, i32) {
    %c0_i32 = arith.constant 0 : i32
    %c0_i32_0 = arith.constant 0 : i32
    return %arg0, %c0_i32 : i32, i32
  }
  func.func @transform_1(%arg0: i32) -> (i32, i32, i32) {
    %c0_i32 = arith.constant 0 : i32
    %c0_i32_0 = arith.constant 0 : i32
    %c0_i32_1 = arith.constant 0 : i32
    return %arg0, %c0_i32, %c0_i32_0 : i32, i32, i32
  }
  func.func @transform_2(%arg0: i32) -> (i32, i32, i32) {
    %c0_i32 = arith.constant 0 : i32
    %c0_i32_0 = arith.constant 0 : i32
    %c0_i32_1 = arith.constant 0 : i32
    return %arg0, %c0_i32, %c0_i32_0 : i32, i32, i32
  }
  func.func @transform_3(%arg0: i32) -> (i32, i32) {
    %c0_i32 = arith.constant 0 : i32
    %c0_i32_0 = arith.constant 0 : i32
    %c0_i32_1 = arith.constant 0 : i32
    return %c0_i32, %c0_i32_0 : i32, i32
  }
  func.func @transform_4(%arg0: i32) -> (i32, i32) {
    %c0_i32 = arith.constant 0 : i32
    %c0_i32_0 = arith.constant 0 : i32
    %c0_i32_1 = arith.constant 0 : i32
    return %c0_i32, %c0_i32_0 : i32, i32
  }
  func.func @transform_5(%arg0: i32) -> (i32, i32) {
    %c0_i32 = arith.constant 0 : i32
    %c0_i32_0 = arith.constant 0 : i32
    %c0_i32_1 = arith.constant 0 : i32
    return %c0_i32, %c0_i32_0 : i32, i32
  }
  func.func @transform_6(%arg0: i32) -> (i32, i32, i32) {
    %c0_i32 = arith.constant 0 : i32
    %c0_i32_0 = arith.constant 0 : i32
    %c0_i32_1 = arith.constant 0 : i32
    return %arg0, %c0_i32, %c0_i32_0 : i32, i32, i32
  }
  func.func @transform_7(%arg0: i32) -> (i32, i32, i32) {
    %c0_i32 = arith.constant 0 : i32
    %c0_i32_0 = arith.constant 0 : i32
    %c0_i32_1 = arith.constant 0 : i32
    return %arg0, %c0_i32, %c0_i32_0 : i32, i32, i32
  }
}

</mosaic_0001>

<llo_original>
// kernel: tpu_custom_call.1
$region0: #{tpu_custom_call.1}
  #allocation0 [shape = 'u32[]', space=smem, size = 0x4, offset = 0x4, fixed_abs, tag = 'smem constant byte address 0x4 - core index']
  #allocation1 [shape = 'u32[72,128]{1,0:T(1,128)}', space=vmem, size = 0x9000, scoped, tag = 'internal scratch']
  %s0 = inlined_call_operand.hbm [shape: f32[16,32], index: 0, kind: input, shape index: {}]
  %s1 = inlined_call_operand.hbm [shape: f32[2,1,32], index: 1, kind: input, shape index: {}]
  %s2 = inlined_call_operand.hbm [shape: f32[2,1,8], index: 2, kind: input, shape index: {}]
  %s3 = inlined_call_operand.hbm [shape: f32[32,32], index: 3, kind: input, shape index: {}]
  %s4 = inlined_call_operand.hbm [shape: f32[32,32], index: 4, kind: input, shape index: {}]
  %s5 = inlined_call_operand.vmem [shape: f32[1,32], index: 5, kind: input, shape index: {}]
  %s6 = inlined_call_operand.hbm [shape: f32[2,1,32], index: 6, kind: output, shape index: {0}]
  %s7 = inlined_call_operand.hbm [shape: f32[2,1,8], index: 7, kind: output, shape index: {1}]
  %8 = xla_tuple %s6, %s7
  %s9 = sld [smem:[#allocation0]]
  $region85: #{tpu_custom_call.1} parent=0
    _
  %s11 = ssub.s32 1, %s9
  %s12 = scalar_select 0, %s11, %s9
  $region1: #{tpu_custom_call.1} parent=0
    #allocation2 [shape = 'u8[8192]{0}', space=vmem, size = 0x2000, scoped, tag = 'input window, operand 0']
    #allocation3 [shape = 's32[2]{0}', space=sflag, size = 0x8, scoped, tag = 'scoped memory for tpu_custom_call.1']
    #allocation4 [shape = 's32[2]{0}', space=sflag, size = 0x8, scoped, tag = 'scoped memory for tpu_custom_call.1']
    #allocation5 [shape = 'u8[1024]{0}', space=vmem, size = 0x400, scoped, tag = 'input window, operand 1']
    #allocation6 [shape = 's32[2]{0}', space=sflag, size = 0x8, scoped, tag = 'scoped memory for tpu_custom_call.1']
    #allocation7 [shape = 'u8[1024]{0}', space=vmem, size = 0x400, scoped, tag = 'input window, operand 2']
    #allocation8 [shape = 'u8[16384]{0}', space=vmem, size = 0x4000, scoped, tag = 'input window, operand 3, single buffered']
    #allocation9 [shape = 's32[1]{0}', space=sflag, size = 0x4, scoped, tag = 'scoped memory for tpu_custom_call.1']
    #allocation10 [shape = 'u8[16384]{0}', space=vmem, size = 0x4000, scoped, tag = 'input window, operand 4, single buffered']
    #allocation11 [shape = 'u8[1024]{0}', space=vmem, size = 0x400, scoped, tag = 'output window, operand 0']
    #allocation12 [shape = 'u8[1024]{0}', space=vmem, size = 0x400, scoped, tag = 'output window, operand 1']
    #allocation13 [shape = 's32[2]{0}', space=sflag, size = 0x8, scoped, tag = 'scoped memory for tpu_custom_call.1']
    %13 = vsyncpa [#allocation3], 0
    %s14 = scalar_lea.sflag [#allocation3], 1
    %15 = vsyncpa %s14, 0
    %16 = vsyncpa [#allocation6], 0
    %s17 = scalar_lea.sflag [#allocation6], 1
    %18 = vsyncpa %s17, 0
    %19 = vsyncpa [#allocation9], 0
    %20 = vsyncpa [#allocation4], 0
    %s21 = scalar_lea.sflag [#allocation4], 1
    %22 = vsyncpa %s21, 0
    %23 = vsyncpa [#allocation13], 0
    %s24 = scalar_lea.sflag [#allocation13], 1
    %25 = vsyncpa %s24, 0
    loop: start=0, step=1, limit=4
    $region2: #{tpu_custom_call.1} parent=1 // loop_pre_header
      _
    $region3: #{tpu_custom_call.1} parent=1 // loop_header
      %s27 = sphi 0, %s31
      %p28 = scmp.ge.s32.totalorder %s27, 4
      %s37 = sphi 0, %s39
      %s40 = sphi 0, %s37
      %s41 = sphi 0, %s40
      %s57 = sphi 0, %s41
      %s63 = sphi 0, %s65
      %s66 = sphi 0, %s63
      %s67 = sphi 0, %s66
      %s83 = sphi 0, %s67
      %s89 = sphi 0, %s91
      %s92 = sphi 0, %s89
      %s93 = sphi 0, %s92
      %s109 = sphi 0, %s93
      %s113 = sphi 0, %s113
      %s115 = sphi 0, %s113
      %s116 = sphi 0, %s115
      %s130 = sphi 0, %s116
      %s134 = sphi 0, %s134
      %s136 = sphi 0, %s134
      %s137 = sphi 0, %s136
      %s151 = sphi 0, %s137
      %s155 = sphi 0, %s155
      %s157 = sphi 0, %s155
      %s158 = sphi 0, %s157
      %s172 = sphi 0, %s158
      %s178 = sphi 0, %s180
      %s181 = sphi 0, %s178
      %s182 = sphi 0, %s181
      %s198 = sphi 0, %s182
      %s204 = sphi 0, %s206
      %s207 = sphi 0, %s204
      %s208 = sphi 0, %s207
      %s224 = sphi 0, %s208
    $region4: #{tpu_custom_call.1} parent=1 // loop_header_branch
      %30 = sbr.rel (%p28) target = $region8
    $region5: #{tpu_custom_call.1} parent=1 // loop_body
      %s32 = ssub.s32 %s27, 1
      %s33 = ssub.s32 %s27, 2
      %s34 = sadd.s32 %s27, 1
      %s35 = ssub.s32 %s27, %s34
      %p36 = scmp.eq.s32.totalorder %s35, 0
      %s38 = sadd.s32 %s37, 1
      %s39 = scalar_select %p36, %s37, %s38
      %p42 = pneg %p36
      %p43 = scmp.eq.s32.totalorder %s27, 1
      %p44 = por %p42, %p43
      %p45 = scmp.ne.s32.totalorder %s37, %s40
      %p46 = scmp.eq.s32.totalorder %s27, 0
      %p47 = por %p45, %p46
      %p48 = scmp.ne.s32.totalorder %s37, %s40
      %p49 = scmp.eq.s32.totalorder %s32, 1
      %p50 = por %p48, %p49
      %p51 = scmp.ne.s32.totalorder %s40, %s41
      %p52 = scmp.eq.s32.totalorder %s32, 0
      %p53 = por %p51, %p52
      %p54 = scmp.ne.s32.totalorder %s40, %s41
      %p55 = scmp.eq.s32.totalorder %s33, 1
      %p56 = por %p54, %p55
      %p58 = scmp.ne.s32.totalorder %s41, %s57
      %p59 = scmp.eq.s32.totalorder %s33, 0
      %p60 = por %p58, %p59
      %s61 = ssub.s32 %s27, %s34
      %p62 = scmp.eq.s32.totalorder %s61, 0
      %s64 = sadd.s32 %s63, 1
      %s65 = scalar_select %p62, %s63, %s64
      %p68 = pneg %p62
      %p69 = scmp.eq.s32.totalorder %s27, 1
      %p70 = por %p68, %p69
      %p71 = scmp.ne.s32.totalorder %s63, %s66
      %p72 = scmp.eq.s32.totalorder %s27, 0
      %p73 = por %p71, %p72
      %p74 = scmp.ne.s32.totalorder %s63, %s66
      %p75 = scmp.eq.s32.totalorder %s32, 1
      %p76 = por %p74, %p75
      %p77 = scmp.ne.s32.totalorder %s66, %s67
      %p78 = scmp.eq.s32.totalorder %s32, 0
      %p79 = por %p77, %p78
      %p80 = scmp.ne.s32.totalorder %s66, %s67
      %p81 = scmp.eq.s32.totalorder %s33, 1
      %p82 = por %p80, %p81
      %p84 = scmp.ne.s32.totalorder %s67, %s83
      %p85 = scmp.eq.s32.totalorder %s33, 0
      %p86 = por %p84, %p85
      %s87 = ssub.s32 %s27, %s34
      %p88 = scmp.eq.s32.totalorder %s87, 0
      %s90 = sadd.s32 %s89, 1
      %s91 = scalar_select %p88, %s89, %s90
      %p94 = pneg %p88
      %p95 = scmp.eq.s32.totalorder %s27, 1
      %p96 = por %p94, %p95
      %p97 = scmp.ne.s32.totalorder %s89, %s92
      %p98 = scmp.eq.s32.totalorder %s27, 0
      %p99 = por %p97, %p98
      %p100 = scmp.ne.s32.totalorder %s89, %s92
      %p101 = scmp.eq.s32.totalorder %s32, 1
      %p102 = por %p100, %p101
      %p103 = scmp.ne.s32.totalorder %s92, %s93
      %p104 = scmp.eq.s32.totalorder %s32, 0
      %p105 = por %p103, %p104
      %p106 = scmp.ne.s32.totalorder %s92, %s93
      %p107 = scmp.eq.s32.totalorder %s33, 1
      %p108 = por %p106, %p107
      %p110 = scmp.ne.s32.totalorder %s93, %s109
      %p111 = scmp.eq.s32.totalorder %s33, 0
      %p112 = por %p110, %p111
      %s114 = sadd.s32 %s113, 1
      %p117 = scmp.eq.s32.totalorder %s27, 1
      %p118 = scmp.ne.s32.totalorder %s113, %s115
      %p119 = scmp.eq.s32.totalorder %s27, 0
      %p120 = por %p118, %p119
      %p121 = scmp.ne.s32.totalorder %s113, %s115
      %p122 = scmp.eq.s32.totalorder %s32, 1
      %p123 = por %p121, %p122
      %p124 = scmp.ne.s32.totalorder %s115, %s116
      %p125 = scmp.eq.s32.totalorder %s32, 0
      %p126 = por %p124, %p125
      %p127 = scmp.ne.s32.totalorder %s115, %s116
      %p128 = scmp.eq.s32.totalorder %s33, 1
      %p129 = por %p127, %p128
      %p131 = scmp.ne.s32.totalorder %s116, %s130
      %p132 = scmp.eq.s32.totalorder %s33, 0
      %p133 = por %p131, %p132
      %s135 = sadd.s32 %s134, 1
      %p138 = scmp.eq.s32.totalorder %s27, 1
      %p139 = scmp.ne.s32.totalorder %s134, %s136
      %p140 = scmp.eq.s32.totalorder %s27, 0
      %p141 = por %p139, %p140
      %p142 = scmp.ne.s32.totalorder %s134, %s136
      %p143 = scmp.eq.s32.totalorder %s32, 1
      %p144 = por %p142, %p143
      %p145 = scmp.ne.s32.totalorder %s136, %s137
      %p146 = scmp.eq.s32.totalorder %s32, 0
      %p147 = por %p145, %p146
      %p148 = scmp.ne.s32.totalorder %s136, %s137
      %p149 = scmp.eq.s32.totalorder %s33, 1
      %p150 = por %p148, %p149
      %p152 = scmp.ne.s32.totalorder %s137, %s151
      %p153 = scmp.eq.s32.totalorder %s33, 0
      %p154 = por %p152, %p153
      %s156 = sadd.s32 %s155, 1
      %p159 = scmp.eq.s32.totalorder %s27, 1
      %p160 = scmp.ne.s32.totalorder %s155, %s157
      %p161 = scmp.eq.s32.totalorder %s27, 0
      %p162 = por %p160, %p161
      %p163 = scmp.ne.s32.totalorder %s155, %s157
      %p164 = scmp.eq.s32.totalorder %s32, 1
      %p165 = por %p163, %p164
      %p166 = scmp.ne.s32.totalorder %s157, %s158
      %p167 = scmp.eq.s32.totalorder %s32, 0
      %p168 = por %p166, %p167
      %p169 = scmp.ne.s32.totalorder %s157, %s158
      %p170 = scmp.eq.s32.totalorder %s33, 1
      %p171 = por %p169, %p170
      %p173 = scmp.ne.s32.totalorder %s158, %s172
      %p174 = scmp.eq.s32.totalorder %s33, 0
      %p175 = por %p173, %p174
      %s176 = ssub.s32 %s27, %s34
      %p177 = scmp.eq.s32.totalorder %s176, 0
      %s179 = sadd.s32 %s178, 1
      %s180 = scalar_select %p177, %s178, %s179
      %p183 = pneg %p177
      %p184 = scmp.eq.s32.totalorder %s27, 1
      %p185 = por %p183, %p184
      %p186 = scmp.ne.s32.totalorder %s178, %s181
      %p187 = scmp.eq.s32.totalorder %s27, 0
      %p188 = por %p186, %p187
      %p189 = scmp.ne.s32.totalorder %s178, %s181
      %p190 = scmp.eq.s32.totalorder %s32, 1
      %p191 = por %p189, %p190
      %p192 = scmp.ne.s32.totalorder %s181, %s182
      %p193 = scmp.eq.s32.totalorder %s32, 0
      %p194 = por %p192, %p193
      %p195 = scmp.ne.s32.totalorder %s181, %s182
      %p196 = scmp.eq.s32.totalorder %s33, 1
      %p197 = por %p195, %p196
      %p199 = scmp.ne.s32.totalorder %s182, %s198
      %p200 = scmp.eq.s32.totalorder %s33, 0
      %p201 = por %p199, %p200
      %s202 = ssub.s32 %s27, %s34
      %p203 = scmp.eq.s32.totalorder %s202, 0
      %s205 = sadd.s32 %s204, 1
      %s206 = scalar_select %p203, %s204, %s205
      %p209 = pneg %p203
      %p210 = scmp.eq.s32.totalorder %s27, 1
      %p211 = por %p209, %p210
      %p212 = scmp.ne.s32.totalorder %s204, %s207
      %p213 = scmp.eq.s32.totalorder %s27, 0
      %p214 = por %p212, %p213
      %p215 = scmp.ne.s32.totalorder %s204, %s207
      %p216 = scmp.eq.s32.totalorder %s32, 1
      %p217 = por %p215, %p216
      %p218 = scmp.ne.s32.totalorder %s207, %s208
      %p219 = scmp.eq.s32.totalorder %s32, 0
      %p220 = por %p218, %p219
      %p221 = scmp.ne.s32.totalorder %s207, %s208
      %p222 = scmp.eq.s32.totalorder %s33, 1
      %p223 = por %p221, %p222
      %p225 = scmp.ne.s32.totalorder %s208, %s224
      %p226 = scmp.eq.s32.totalorder %s33, 0
      %p227 = por %p225, %p226
      %p228 = scmp.le.s32.totalorder 1, %s27
      %p229 = scmp.lt.s32.totalorder %s27, 3
      %p230 = pnand %p228, %p229
      %p231 = pneg %p230
      // Predicated region
      $region9: #{tpu_custom_call.1} parent=5 // pred_check
        _
      $region10: #{tpu_custom_call.1} parent=5 // pred_check_branch
        %233 = sbr.rel (%p230) target = $region12
      $region11: #{tpu_custom_call.1} parent=5 // pred_region
        %s234 = ssub.s32 %s27, 1
        // Predicated region
        $region13: #{tpu_custom_call.1} parent=11 // pred_check
          %p235 = pneg %p126
        $region14: #{tpu_custom_call.1} parent=11 // pred_check_branch
          %237 = sbr.rel (%p235) target = $region16
        $region15: #{tpu_custom_call.1} parent=11 // pred_region
          %239 = vsyncadd [#allocation9], 0
          %s240 = sshll.u32 %s3, 4
          %s241 = int_to_ptr.hbm [resolvable:$true] %s240
          %s242 = sshll.u32 [#allocation8], 4
          %s243 = int_to_ptr.vmem [resolvable:$true] %s242
          %248 = dma.hbm_to_vmem [thread:$0]  %s241, 512, %s243, [#allocation9], 128, 128, 8
        $region16: #{tpu_custom_call.1} parent=11 // pred_fallthru
          _
        // Predicated region
        $region17: #{tpu_custom_call.1} parent=11 // pred_check
          %p249 = pneg %p147
        $region18: #{tpu_custom_call.1} parent=11 // pred_check_branch
          %251 = sbr.rel (%p249) target = $region20
        $region19: #{tpu_custom_call.1} parent=11 // pred_region
          %253 = vsyncadd [#allocation9], 0
          %s254 = sshll.u32 %s4, 4
          %s255 = int_to_ptr.hbm [resolvable:$true] %s254
          %s256 = sshll.u32 [#allocation10], 4
          %s257 = int_to_ptr.vmem [resolvable:$true] %s256
          %262 = dma.hbm_to_vmem [thread:$0]  %s255, 512, %s257, [#allocation9], 128, 128, 8
        $region20: #{tpu_custom_call.1} parent=11 // pred_fallthru
          _
        // Predicated region
        $region21: #{tpu_custom_call.1} parent=11 // pred_check
          %p263 = pneg %p168
        $region22: #{tpu_custom_call.1} parent=11 // pred_check_branch
          %265 = sbr.rel (%p263) target = $region24
        $region23: #{tpu_custom_call.1} parent=11 // pred_region
          _
        $region24: #{tpu_custom_call.1} parent=11 // pred_fallthru
          _
      $region12: #{tpu_custom_call.1} parent=5 // pred_fallthru
        _
      %p266 = scmp.lt.s32.totalorder %s27, 2
      // Predicated region
      $region25: #{tpu_custom_call.1} parent=5 // pred_check
        %p267 = pneg %p266
      $region26: #{tpu_custom_call.1} parent=5 // pred_check_branch
        %269 = sbr.rel (%p267) target = $region28
      $region27: #{tpu_custom_call.1} parent=5 // pred_region
        // Predicated region
        $region29: #{tpu_custom_call.1} parent=27 // pred_check
          %p270 = pneg %p47
        $region30: #{tpu_custom_call.1} parent=27 // pred_check_branch
          %272 = sbr.rel (%p270) target = $region32
        $region31: #{tpu_custom_call.1} parent=27 // pred_region
          %s273 = sand.u32 %s37, 1
          %s274 = scalar_lea.sflag [#allocation3], %s273
          %s275 = sand.u32 %s37, 1
          %s276 = smul.addr %s275, 8
          %s277 = scalar_lea.vmem [#allocation2], %s276
          %279 = vsyncadd %s274, 0
          %s280 = smul.addr %s27, 8
          %s281 = scalar_lea.hbm %s0, %s280
          %s283 = sshll.u32 %s281, 4
          %s284 = int_to_ptr.hbm [resolvable:$true] %s283
          %s285 = sshll.u32 %s277, 4
          %s286 = int_to_ptr.vmem [resolvable:$true] %s285
          %288 = dma.hbm_to_vmem [thread:$0]  %s284, 128, %s286, %s274
        $region32: #{tpu_custom_call.1} parent=27 // pred_fallthru
          _
        // Predicated region
        $region33: #{tpu_custom_call.1} parent=27 // pred_check
          %p289 = pneg %p73
        $region34: #{tpu_custom_call.1} parent=27 // pred_check_branch
          %291 = sbr.rel (%p289) target = $region36
        $region35: #{tpu_custom_call.1} parent=27 // pred_region
          %s292 = sand.u32 %s27, 1
          %s293 = scalar_lea.sflag [#allocation6], %s292
          %s294 = sand.u32 %s63, 1
          %s295 = scalar_lea.vmem [#allocation5], %s294
          %297 = vsyncadd %s293, 0
          %s298 = scalar_lea.hbm %s1, %s27
          %s300 = sshll.u32 %s298, 4
          %s301 = int_to_ptr.hbm [resolvable:$true] %s300
          %s302 = sshll.u32 %s295, 4
          %s303 = int_to_ptr.vmem [resolvable:$true] %s302
          %305 = dma.hbm_to_vmem [thread:$0]  %s301, 16, %s303, %s293
        $region36: #{tpu_custom_call.1} parent=27 // pred_fallthru
          _
        // Predicated region
        $region37: #{tpu_custom_call.1} parent=27 // pred_check
          %p306 = pneg %p99
        $region38: #{tpu_custom_call.1} parent=27 // pred_check_branch
          %308 = sbr.rel (%p306) target = $region40
        $region39: #{tpu_custom_call.1} parent=27 // pred_region
          %s309 = sand.u32 %s27, 1
          %s310 = scalar_lea.sflag [#allocation6], %s309
          %s311 = sand.u32 %s89, 1
          %s312 = scalar_lea.vmem [#allocation7], %s311
          %314 = vsyncadd %s310, 0
          %s315 = scalar_lea.hbm %s2, %s27
          %s317 = sshll.u32 %s315, 4
          %s318 = int_to_ptr.hbm [resolvable:$true] %s317
          %s319 = sshll.u32 %s312, 4
          %s320 = int_to_ptr.vmem [resolvable:$true] %s319
          %322 = dma.hbm_to_vmem [thread:$0]  %s318, 16, %s320, %s310
        $region40: #{tpu_custom_call.1} parent=27 // pred_fallthru
          _
      $region28: #{tpu_custom_call.1} parent=5 // pred_fallthru
        _
      %p323 = scmp.le.s32.totalorder 1, %s27
      %p324 = scmp.lt.s32.totalorder %s27, 3
      %p325 = pnand %p323, %p324
      %p326 = pneg %p325
      // Predicated region
      $region41: #{tpu_custom_call.1} parent=5 // pred_check
        _
      $region42: #{tpu_custom_call.1} parent=5 // pred_check_branch
        %328 = sbr.rel (%p325) target = $region44
      $region43: #{tpu_custom_call.1} parent=5 // pred_region
        %s329 = ssub.s32 %s27, 1
        %s330 = sand.u32 %s40, 1
        %s331 = scalar_lea.sflag [#allocation3], %s330
        %s332 = sand.u32 %s40, 1
        %s333 = smul.addr %s332, 8
        %s334 = scalar_lea.vmem [#allocation2], %s333
        // Predicated region
        $region45: #{tpu_custom_call.1} parent=43 // pred_check
          %p335 = pneg %p53
        $region46: #{tpu_custom_call.1} parent=43 // pred_check_branch
          %337 = sbr.rel (%p335) target = $region48
        $region47: #{tpu_custom_call.1} parent=43 // pred_region
          %339 = dma.done %s331, 128
        $region48: #{tpu_custom_call.1} parent=43 // pred_fallthru
          _
        %s340 = sand.u32 %s32, 1
        %s341 = scalar_lea.sflag [#allocation6], %s340
        %s342 = sand.u32 %s66, 1
        %s343 = scalar_lea.vmem [#allocation5], %s342
        // Predicated region
        $region49: #{tpu_custom_call.1} parent=43 // pred_check
          %p344 = pneg %p79
        $region50: #{tpu_custom_call.1} parent=43 // pred_check_branch
          %346 = sbr.rel (%p344) target = $region52
        $region51: #{tpu_custom_call.1} parent=43 // pred_region
          %348 = dma.done %s341, 16
        $region52: #{tpu_custom_call.1} parent=43 // pred_fallthru
          _
        %s349 = sand.u32 %s32, 1
        %s350 = scalar_lea.sflag [#allocation6], %s349
        %s351 = sand.u32 %s92, 1
        %s352 = scalar_lea.vmem [#allocation7], %s351
        // Predicated region
        $region53: #{tpu_custom_call.1} parent=43 // pred_check
          %p353 = pneg %p105
        $region54: #{tpu_custom_call.1} parent=43 // pred_check_branch
          %355 = sbr.rel (%p353) target = $region56
        $region55: #{tpu_custom_call.1} parent=43 // pred_region
          %357 = dma.done %s350, 16
        $region56: #{tpu_custom_call.1} parent=43 // pred_fallthru
          _
        // Predicated region
        $region57: #{tpu_custom_call.1} parent=43 // pred_check
          %p358 = pneg %p126
        $region58: #{tpu_custom_call.1} parent=43 // pred_check_branch
          %360 = sbr.rel (%p358) target = $region60
        $region59: #{tpu_custom_call.1} parent=43 // pred_region
          %362 = dma.done [#allocation9], 512
        $region60: #{tpu_custom_call.1} parent=43 // pred_fallthru
          _
        // Predicated region
        $region61: #{tpu_custom_call.1} parent=43 // pred_check
          %p363 = pneg %p147
        $region62: #{tpu_custom_call.1} parent=43 // pred_check_branch
          %365 = sbr.rel (%p363) target = $region64
        $region63: #{tpu_custom_call.1} parent=43 // pred_region
          %367 = dma.done [#allocation9], 512
        $region64: #{tpu_custom_call.1} parent=43 // pred_fallthru
          _
        %s368 = sand.u32 %s40, 1
        %s369 = scalar_lea.sflag [#allocation3], %s368
        %s370 = sand.u32 %s40, 1
        %s371 = smul.addr %s370, 8
        %s372 = scalar_lea.vmem [#allocation2], %s371
        %p373 = pneg %p53
        %p374 = pneg %p50
        %s375 = sand.u32 %s32, 1
        %s376 = scalar_lea.sflag [#allocation6], %s375
        %s377 = sand.u32 %s66, 1
        %s378 = scalar_lea.vmem [#allocation5], %s377
        %p379 = pneg %p79
        %p380 = pneg %p76
        %s381 = sand.u32 %s32, 1
        %s382 = scalar_lea.sflag [#allocation6], %s381
        %s383 = sand.u32 %s92, 1
        %s384 = scalar_lea.vmem [#allocation7], %s383
        %p385 = pneg %p105
        %p386 = pneg %p102
        %p387 = pneg %p126
        %p388 = pneg %p123
        %p389 = pneg %p147
        %p390 = pneg %p144
        %p391 = pneg %p168
        %p392 = pneg %p165
        %p393 = pneg %p194
        %p394 = pneg %p191
        %s395 = sand.u32 %s181, 1
        %s396 = scalar_lea.sflag [#allocation4], %s395
        %s397 = sand.u32 %s181, 1
        %s398 = scalar_lea.vmem [#allocation11], %s397
        %p399 = pneg %p220
        %p400 = pneg %p217
        %s401 = sand.u32 %s207, 1
        %s402 = scalar_lea.sflag [#allocation13], %s401
        %s403 = sand.u32 %s207, 1
        %s404 = scalar_lea.vmem [#allocation12], %s403
        %v405 = vld [vmem:[%s334] sm:$0xff]
        %v406 = vld [vmem:[#allocation8] sm:$0xff]
        %v407 = vld [vmem:[#allocation8 + $0x8] sm:$0xff]
        %v408 = vld [vmem:[#allocation8 + $0x10] sm:$0xff]
        %v409 = vld [vmem:[#allocation8 + $0x18] sm:$0xff]
        %vm410 = vcmask 261120
        %v412 = vsel %vm410, %v405, 0
        %414 = vmatpush.msra.mxu0 0.0
        %415 = vmatpush.msra.mxu0 0.0
        %416 = vmatpush.msra.mxu0 0.0
        %417 = vmatpush.msra.mxu0 0.0
        %418 = vmatpush.msra.mxu0 0.0
        %419 = vmatpush.msra.mxu0 0.0
        %420 = vmatpush.msra.mxu0 0.0
        %421 = vmatpush.msra.mxu0 0.0
        %422 = vmatpush.msra.mxu0 0.0
        %423 = vmatpush.msra.mxu0 0.0
        %424 = vmatpush.msra.mxu0 0.0
        %425 = vmatpush.msra.mxu0 0.0
        %426 = vmatpush.msra.mxu0 %v409
        %427 = vmatpush.msra.mxu0 %v408
        %428 = vmatpush.msra.mxu0 %v407
        %429 = vmatpush.msra.mxu0 %v406
        %430 = vmatmul.f32.gmra.mxu0 %v412
        %v431 = vpop.f32.mrf.mxu0
        %v432 = vadd.f32 0.0, %v431
        %433 = vdwg.mxu0
        %v434 = vld [vmem:[%s343] sm:$0x1]
        %v436 = vperm.slane %v434, 0
        %v438 = vadd.f32 %v432, %v436
        %v439 = vtanh.pop %v438
        %v440 = vld [vmem:[%s5] sm:$0x1]
        %v442 = vperm.slane %v440, 0
        %v444 = vmul.f32 %v439, %v442
        %v445 = vsel %vm410, %v444, 0.0
        %446 = vadd.xlane.f32.xlu0 %v445
        %v447 = vpop.xlane.xlu0 %446
        %v448 = vld [vmem:[%s352] sm:$0x1]
        %vm449 = vcmp.gt.f32.partialorder %v448, 0.5
        %v451 = vperm.slane %v447, 0
        %v452 = vperm.slane %v447, 1
        %v453 = vperm.slane %v447, 2
        %v454 = vperm.slane %v447, 3
        %v455 = vperm.slane %v447, 4
        %v456 = vperm.slane %v447, 5
        %v457 = vperm.slane %v447, 6
        %v458 = vperm.slane %v447, 7
        %459 = vst [vmem:[#allocation1] ss:$9 sm:$0xff] %v451
        %s460 = scalar_lea.vmem [#allocation1], 1
        %461 = vst [vmem:[%s460] ss:$9 sm:$0xff] %v452
        %s462 = scalar_lea.vmem [#allocation1], 2
        %463 = vst [vmem:[%s462] ss:$9 sm:$0xff] %v453
        %s464 = scalar_lea.vmem [#allocation1], 3
        %465 = vst [vmem:[%s464] ss:$9 sm:$0xff] %v454
        %s466 = scalar_lea.vmem [#allocation1], 4
        %467 = vst [vmem:[%s466] ss:$9 sm:$0xff] %v455
        %s468 = scalar_lea.vmem [#allocation1], 5
        %469 = vst [vmem:[%s468] ss:$9 sm:$0xff] %v456
        %s470 = scalar_lea.vmem [#allocation1], 6
        %471 = vst [vmem:[%s470] ss:$9 sm:$0xff] %v457
        %s472 = scalar_lea.vmem [#allocation1], 7
        %473 = vst [vmem:[%s472] ss:$9 sm:$0xff] %v458
        %v474 = vld [vmem:[#allocation1] sm:$0xff]
        %475 = vset.pattern.permute.xlu0 0
        %476 = vperm.xlu0 %475, %v474
        %v477 = vpop.permute.xlu0 %476
        %v478 = vlaneseq
        %v479 = vand.u32 %v478, 127
        %v480 = vperm.slane %v477, %v479
        %v482 = vsel %vm449, %v480, -inf
        %vm483 = vcmask 57344
        %v484 = vsel %vm483, %v482, -inf
        %485 = vmax.xlane.f32.xlu0 %v484
        %v486 = vpop.xlane.xlu0 %485
        %v487 = vsub.f32 %v482, %v486
        %v488 = vmul.f32 %v487, 1.442695
        %v489 = vpow.pop %v488
        %v490 = vsel %vm483, %v489, 0.0
        %491 = vadd.xlane.f32.xlu0 %v490
        %v492 = vpop.xlane.xlu0 %491
        %v493 = vrcp.pop %v492
        %v494 = vmul.f32 %v489, %v493
        %v495 = vperm.slane %v494, 0
        %v496 = vlaneseq
        %v497 = vshrl.u32 %v496, 7
        %499 = vset.pattern.permute.xlu0 %v497
        %500 = vperm.xlu0 %499, %v495
        %v501 = vpop.permute.xlu0 %500
        %v502 = vmul.f32 %v501, %v405
        %v503 = vsel %vm410, %v502, 0.0
        %v504 = vrot.slane %v503, 4
        %v505 = vadd.f32 %v503, %v504
        %v506 = vrot.slane %v505, 2
        %v507 = vadd.f32 %v505, %v506
        %v508 = vrot.slane %v507, 1
        %v509 = vadd.f32 %v507, %v508
        %v510 = vld [vmem:[#allocation10] sm:$0xff]
        %v511 = vld [vmem:[#allocation10 + $0x8] sm:$0xff]
        %v512 = vld [vmem:[#allocation10 + $0x10] sm:$0xff]
        %v513 = vld [vmem:[#allocation10 + $0x18] sm:$0xff]
        %v515 = vsel %vm410, %v509, 0
        %517 = vmatpush.msra.mxu0 0.0
        %518 = vmatpush.msra.mxu0 0.0
        %519 = vmatpush.msra.mxu0 0.0
        %520 = vmatpush.msra.mxu0 0.0
        %521 = vmatpush.msra.mxu0 0.0
        %522 = vmatpush.msra.mxu0 0.0
        %523 = vmatpush.msra.mxu0 0.0
        %524 = vmatpush.msra.mxu0 0.0
        %525 = vmatpush.msra.mxu0 0.0
        %526 = vmatpush.msra.mxu0 0.0
        %527 = vmatpush.msra.mxu0 0.0
        %528 = vmatpush.msra.mxu0 0.0
        %529 = vmatpush.msra.mxu0 %v513
        %530 = vmatpush.msra.mxu0 %v512
        %531 = vmatpush.msra.mxu0 %v511
        %532 = vmatpush.msra.mxu0 %v510
        %533 = vmatmul.f32.gmra.mxu0 %v515
        %v534 = vpop.f32.mrf.mxu0
        %v535 = vadd.f32 0.0, %v534
        %536 = vdwg.mxu0
        %vm537 = vcmask 253952
        %538 = vst.msk [vmem:[%s398] sm:$0x1] %vm537, %v535
        %539 = vst.msk [vmem:[%s404] sm:$0x1] %vm483, %v494
        %s540 = sand.u32 %s181, 1
        %s541 = scalar_lea.sflag [#allocation4], %s540
        %s542 = sand.u32 %s181, 1
        %s543 = scalar_lea.vmem [#allocation11], %s542
        %s544 = sand.u32 %s207, 1
        %s545 = scalar_lea.sflag [#allocation13], %s544
        %s546 = sand.u32 %s207, 1
        %s547 = scalar_lea.vmem [#allocation12], %s546
        // Predicated region
        $region65: #{tpu_custom_call.1} parent=43 // pred_check
          %p548 = pneg %p191
        $region66: #{tpu_custom_call.1} parent=43 // pred_check_branch
          %550 = sbr.rel (%p548) target = $region68
        $region67: #{tpu_custom_call.1} parent=43 // pred_region
          %552 = vsyncadd %s541, 0
          %s553 = scalar_lea.hbm %s6, %s32
          %s555 = sshll.u32 %s543, 4
          %s556 = int_to_ptr.vmem [resolvable:$true] %s555
          %s557 = sshll.u32 %s553, 4
          %s558 = int_to_ptr.hbm [resolvable:$true] %s557
          %560 = dma.vmem_to_hbm [thread:$0]  %s556, 16, %s558, %s541
        $region68: #{tpu_custom_call.1} parent=43 // pred_fallthru
          _
        // Predicated region
        $region69: #{tpu_custom_call.1} parent=43 // pred_check
          %p561 = pneg %p217
        $region70: #{tpu_custom_call.1} parent=43 // pred_check_branch
          %563 = sbr.rel (%p561) target = $region72
        $region71: #{tpu_custom_call.1} parent=43 // pred_region
          %565 = vsyncadd %s545, 0
          %s566 = scalar_lea.hbm %s7, %s32
          %s568 = sshll.u32 %s547, 4
          %s569 = int_to_ptr.vmem [resolvable:$true] %s568
          %s570 = sshll.u32 %s566, 4
          %s571 = int_to_ptr.hbm [resolvable:$true] %s570
          %573 = dma.vmem_to_hbm [thread:$0]  %s569, 16, %s571, %s545
        $region72: #{tpu_custom_call.1} parent=43 // pred_fallthru
          _
      $region44: #{tpu_custom_call.1} parent=5 // pred_fallthru
        _
      %p574 = scmp.le.s32.totalorder 2, %s27
      // Predicated region
      $region73: #{tpu_custom_call.1} parent=5 // pred_check
        %p575 = pneg %p574
      $region74: #{tpu_custom_call.1} parent=5 // pred_check_branch
        %577 = sbr.rel (%p575) target = $region76
      $region75: #{tpu_custom_call.1} parent=5 // pred_region
        %s578 = ssub.s32 %s27, 2
        // Predicated region
        $region77: #{tpu_custom_call.1} parent=75 // pred_check
          %p579 = pneg %p197
        $region78: #{tpu_custom_call.1} parent=75 // pred_check_branch
          %581 = sbr.rel (%p579) target = $region80
        $region79: #{tpu_custom_call.1} parent=75 // pred_region
          %s582 = sand.u32 %s182, 1
          %s583 = scalar_lea.sflag [#allocation4], %s582
          %s584 = sand.u32 %s182, 1
          %s585 = scalar_lea.vmem [#allocation11], %s584
          %587 = dma.done %s583, 16
        $region80: #{tpu_custom_call.1} parent=75 // pred_fallthru
          _
        // Predicated region
        $region81: #{tpu_custom_call.1} parent=75 // pred_check
          %p588 = pneg %p223
        $region82: #{tpu_custom_call.1} parent=75 // pred_check_branch
          %590 = sbr.rel (%p588) target = $region84
        $region83: #{tpu_custom_call.1} parent=75 // pred_region
          %s591 = sand.u32 %s208, 1
          %s592 = scalar_lea.sflag [#allocation13], %s591
          %s593 = sand.u32 %s208, 1
          %s594 = scalar_lea.vmem [#allocation12], %s593
          %596 = dma.done %s592, 16
        $region84: #{tpu_custom_call.1} parent=75 // pred_fallthru
          _
      $region76: #{tpu_custom_call.1} parent=5 // pred_fallthru
        _
    $region6: #{tpu_custom_call.1} parent=1 // loop_footer
      %s31 = sadd.s32 1, %s27
    $region7: #{tpu_custom_call.1} parent=1 // loop_footer_branch
      %26 = sbr.rel target = $region3
    $region8: #{tpu_custom_call.1} parent=1 // loop_exit
      _
    %597 = vsyncpa [#allocation3], 1
    %s598 = scalar_lea.sflag [#allocation3], 1
    %599 = vsyncpa %s598, 1
    %600 = vsyncpa [#allocation6], 1
    %s601 = scalar_lea.sflag [#allocation6], 1
    %602 = vsyncpa %s601, 1
    %603 = vsyncpa [#allocation9], 1
    %604 = vsyncpa [#allocation4], 1
    %s605 = scalar_lea.sflag [#allocation4], 1
    %606 = vsyncpa %s605, 1
    %607 = vsyncpa [#allocation13], 1
    %s608 = scalar_lea.sflag [#allocation13], 1
    %609 = vsyncpa %s608, 1

</llo_original>
